<compile_context>
chip_gen: v7x
topology: tpu7x:2x2x1
jax: 0.10.0
libtpu: 0.0.40
codegen_flags: <defaults>
</compile_context>

<pallas_src>
import math

import jax
import jax.numpy as jnp
from jax.experimental import pallas as pl
from jax.experimental.pallas import tpu as pltpu


# ----------------------------------------------------------------------------
# Pallas kernel: synthetic control_model + CFG + DDIM step, fully fused,
# single grid point, pure VPU/EUP (no MXU), all scalars in SMEM.
# ----------------------------------------------------------------------------
def _cdvae_kernel(
    img_ref,      # (B*C, HW) VMEM f32   latent, channels of each batch contiguous
    w_ref,        # (C, C)    SMEM f32   1x1-conv channel-mix weight
    bias_c_ref,   # (B, C)    SMEM f32   b_img + t_bias + cond_bias + hint_bias
    bias_u_ref,   # (B, C)    SMEM f32   b_img + t_bias
    coef_ref,     # (B, 2)    SMEM f32   [k_img, k_e] folded DDIM coefficients
    out_ref,      # (B*C, HW) VMEM f32
):
    B = bias_c_ref.shape[0]
    C = w_ref.shape[0]

    for b in range(B):                       # static unroll (B=2)
        k_img = coef_ref[b, 0]
        k_e = coef_ref[b, 1]

        # Load this batch's C channel rows once (each row: (HW,) = 256 lanes).
        rows = [img_ref[b * C + c, :] for c in range(C)]

        for o in range(C):                   # static unroll (C=4)
            # channel mix as scalar-broadcast FMAs (weights from SMEM, no MXU)
            base = w_ref[o, 0] * rows[0]
            for c in range(1, C):
                base = base + w_ref[o, c] * rows[c]

            m_t = jnp.tanh(base + bias_c_ref[b, o])     # conditioned branch (EUP)
            m_u = jnp.tanh(base + bias_u_ref[b, o])     # unconditional branch (EUP)

            # CFG scale 9:  u + 9*(t - u)  ==  9*t - 8*u
            e_t = 9.0 * m_t - 8.0 * m_u

            # folded DDIM update: out = k_img*img + k_e*e_t
            out_ref[b * C + o, :] = (k_img * rows[o] + k_e * e_t).astype(out_ref.dtype)


# ----------------------------------------------------------------------------
# JAX glue: parameter init, conditioning projections, pallas_call wrapper.
# ----------------------------------------------------------------------------
def timestep_embedding(t, dim):
    half = dim // 2
    freqs = jnp.exp(-math.log(10000.0) * jnp.arange(half, dtype=jnp.float32) / half)
    args = t.astype(jnp.float32)[:, None] * freqs[None, :]
    return jnp.concatenate([jnp.cos(args), jnp.sin(args)], axis=-1)  # (B, dim)


def init_params(key, c, hidden, hint_c, temb_dim=32):
    k = jax.random.split(key, 5)
    return {
        "w_img": 0.3 * jax.random.normal(k[0], (c, c), jnp.float32),
        "b_img": 0.1 * jax.random.normal(k[1], (c,), jnp.float32),
        "w_temb": 0.05 * jax.random.normal(k[2], (temb_dim, c), jnp.float32),
        "w_cond": 0.05 * jax.random.normal(k[3], (hidden, c), jnp.float32),
        "w_hint": 0.05 * jax.random.normal(k[4], (hint_c, c), jnp.float32),
    }


def control_diff_vae_step(params, img, ts, ts_df, conds_all, c_hint,
                          a_t, a_prev, sqrt_one_minus_at):
    B, C, H, W = img.shape
    HW = H * W
    temb_dim = params["w_temb"].shape[0]

    # --- tiny conditioning projections (glue, not the hot path) ---
    temb = timestep_embedding(ts, temb_dim) + timestep_embedding(ts_df, temb_dim)
    tbias = temb @ params["w_temb"]                              # (B, C)
    cbias = jnp.mean(conds_all, axis=1) @ params["w_cond"]       # (B, C)
    hbias = jnp.mean(c_hint, axis=(2, 3)) @ params["w_hint"]     # (B, C)
    b_img = params["b_img"][None, :]                             # (1, C)

    # pre-combined biases (removes 3 VMEM DMAs + per-branch broadcast adds)
    bias_cond = (b_img + tbias + cbias + hbias).astype(jnp.float32)   # (B, C)
    bias_uncond = (b_img + tbias).astype(jnp.float32)                 # (B, C)

    # fold DDIM scalars:
    #   out = sqrt(a_prev)*(img - s1m*e_t)/a_t + sqrt(1-a_prev)*e_t
    #       = k_img*img + k_e*e_t
    a_t_f = a_t.reshape(B).astype(jnp.float32)
    a_prev_f = a_prev.reshape(B).astype(jnp.float32)
    s1m_f = sqrt_one_minus_at.reshape(B).astype(jnp.float32)
    k_img = jnp.sqrt(a_prev_f) / a_t_f
    k_e = jnp.sqrt(1.0 - a_prev_f) - jnp.sqrt(a_prev_f) * s1m_f / a_t_f
    coef = jnp.stack([k_img, k_e], axis=-1)                           # (B, 2)

    # dense layout: (B*C, HW) = (8, 256), exact (8,128) tile multiples
    img_f = img.reshape(B * C, HW).astype(jnp.float32)

    smem = pl.BlockSpec(memory_space=pltpu.MemorySpace.SMEM)
    vmem = pl.BlockSpec(memory_space=pltpu.MemorySpace.VMEM)

    out = pl.pallas_call(
        _cdvae_kernel,
        out_shape=jax.ShapeDtypeStruct((B * C, HW), jnp.float32),
        in_specs=[vmem, smem, smem, smem, smem],
        out_specs=vmem,
    )(img_f, params["w_img"].astype(jnp.float32), bias_cond, bias_uncond, coef)

    return out.reshape(B, C, H, W).astype(img.dtype)


# Pure-JAX reference of the same computation, written in the *original*
# (unfolded) form of the PyTorch spec, to validate the algebraic folding.
def control_diff_vae_ref(params, img, ts, ts_df, conds_all, c_hint,
                         a_t, a_prev, sqrt_one_minus_at):
    B, C, H, W = img.shape
    temb_dim = params["w_temb"].shape[0]
    temb = timestep_embedding(ts, temb_dim) + timestep_embedding(ts_df, temb_dim)
    tbias = (temb @ params["w_temb"]).reshape(B, C, 1, 1)
    cbias = (jnp.mean(conds_all, axis=1) @ params["w_cond"]).reshape(B, C, 1, 1)
    hbias = (jnp.mean(c_hint, axis=(2, 3)) @ params["w_hint"]).reshape(B, C, 1, 1)
    base = jnp.einsum("oc,bchw->bohw", params["w_img"], img) \
        + params["b_img"].reshape(1, C, 1, 1)
    model_t = jnp.tanh(base + tbias + cbias + hbias)
    model_uncond = jnp.tanh(base + tbias)
    e_t = model_uncond + 9.0 * (model_t - model_uncond)
    a_t = a_t.reshape(B, 1, 1, 1)
    a_prev = a_prev.reshape(B, 1, 1, 1)
    s1m = sqrt_one_minus_at.reshape(B, 1, 1, 1)
    # NOTE: spec divides by a_t (not sqrt(a_t)); kept verbatim for fidelity.
    pred_x0 = (img - s1m * e_t) / a_t
    dir_xt = jnp.sqrt(1.0 - a_prev) * e_t
    return jnp.sqrt(a_prev) * pred_x0 + dir_xt


if __name__ == "__main__":
    # Small shapes consistent with the module's forward:
    #   img:        latent image,       [B, C, H, W]     = [2, 4, 16, 16]
    #   ts, ts_df:  timesteps,          [B]
    #   conds_all:  text conditioning,  [B, seq, hidden] = [2, 8, 32]
    #   c_hint:     control hint,       [B, 3, 16, 16]
    #   a_t, a_prev, sqrt_one_minus_at: per-batch DDIM scalars [B, 1, 1, 1]
    B, C, H, W = 2, 4, 16, 16
    SEQ, HIDDEN, HINT_C = 8, 32, 3

    key = jax.random.PRNGKey(0)
    k_img, k_cond, k_hint, k_param = jax.random.split(key, 4)

    params = init_params(k_param, C, HIDDEN, HINT_C)

    img = jax.random.normal(k_img, (B, C, H, W), jnp.float32)
    ts = jnp.array([500, 500], dtype=jnp.int32)
    ts_df = jnp.array([10, 10], dtype=jnp.int32)
    conds_all = jax.random.normal(k_cond, (B, SEQ, HIDDEN), jnp.float32)
    c_hint = jax.random.normal(k_hint, (B, HINT_C, H, W), jnp.float32)
    a_t = jnp.full((B, 1, 1, 1), 0.70, jnp.float32)
    a_prev = jnp.full((B, 1, 1, 1), 0.80, jnp.float32)
    sqrt_one_minus_at = jnp.sqrt(1.0 - a_t)

    out = control_diff_vae_step(params, img, ts, ts_df, conds_all, c_hint,
                                a_t, a_prev, sqrt_one_minus_at)
    out = jax.block_until_ready(out)

    ref = control_diff_vae_ref(params, img, ts, ts_df, conds_all, c_hint,
                               a_t, a_prev, sqrt_one_minus_at)
    assert out.shape == (B, C, H, W)
    assert jnp.allclose(out, ref, atol=1e-3, rtol=1e-3), "mismatch vs reference"

    print("KERNEL_OK")
</pallas_src>

<mosaic_0001>
module attributes {stable_mosaic.version = 11 : i64} {
  func.func @_cdvae_kernel(%arg0: memref<8x256xf32, #tpu.memory_space<vmem>>, %arg1: memref<4x4xf32, #tpu.memory_space<smem>>, %arg2: memref<2x4xf32, #tpu.memory_space<smem>>, %arg3: memref<2x4xf32, #tpu.memory_space<smem>>, %arg4: memref<2x2xf32, #tpu.memory_space<smem>>, %arg5: memref<8x256xf32, #tpu.memory_space<vmem>>) attributes {dimension_semantics = [], scalar_prefetch = 0 : i64, scratch_operands = 0 : i64, tpu.core_type = #tpu.core_type<tc>} {
    %c0 = arith.constant 0 : index
    %c0_0 = arith.constant 0 : index
    %0 = memref.load %arg4[%c0, %c0_0] : memref<2x2xf32, #tpu.memory_space<smem>>
    %c0_1 = arith.constant 0 : index
    %c1 = arith.constant 1 : index
    %1 = memref.load %arg4[%c0_1, %c1] : memref<2x2xf32, #tpu.memory_space<smem>>
    %c0_2 = arith.constant 0 : index
    %c0_3 = arith.constant 0 : index
    %2 = vector.load %arg0[%c0_2, %c0_3] : memref<8x256xf32, #tpu.memory_space<vmem>>, vector<1x256xf32>
    %3 = vector.shape_cast %2 : vector<1x256xf32> to vector<256xf32>
    %c1_4 = arith.constant 1 : index
    %c0_5 = arith.constant 0 : index
    %4 = vector.load %arg0[%c1_4, %c0_5] : memref<8x256xf32, #tpu.memory_space<vmem>>, vector<1x256xf32>
    %5 = vector.shape_cast %4 : vector<1x256xf32> to vector<256xf32>
    %c2 = arith.constant 2 : index
    %c0_6 = arith.constant 0 : index
    %6 = vector.load %arg0[%c2, %c0_6] : memref<8x256xf32, #tpu.memory_space<vmem>>, vector<1x256xf32>
    %7 = vector.shape_cast %6 : vector<1x256xf32> to vector<256xf32>
    %c3 = arith.constant 3 : index
    %c0_7 = arith.constant 0 : index
    %8 = vector.load %arg0[%c3, %c0_7] : memref<8x256xf32, #tpu.memory_space<vmem>>, vector<1x256xf32>
    %9 = vector.shape_cast %8 : vector<1x256xf32> to vector<256xf32>
    %c0_8 = arith.constant 0 : index
    %c0_9 = arith.constant 0 : index
    %10 = memref.load %arg1[%c0_8, %c0_9] : memref<4x4xf32, #tpu.memory_space<smem>>
    %11 = vector.broadcast %10 : f32 to vector<256xf32>
    %12 = arith.mulf %11, %3 : vector<256xf32>
    %c0_10 = arith.constant 0 : index
    %c1_11 = arith.constant 1 : index
    %13 = memref.load %arg1[%c0_10, %c1_11] : memref<4x4xf32, #tpu.memory_space<smem>>
    %14 = vector.broadcast %13 : f32 to vector<256xf32>
    %15 = arith.mulf %14, %5 : vector<256xf32>
    %16 = arith.addf %12, %15 : vector<256xf32>
    %c0_12 = arith.constant 0 : index
    %c2_13 = arith.constant 2 : index
    %17 = memref.load %arg1[%c0_12, %c2_13] : memref<4x4xf32, #tpu.memory_space<smem>>
    %18 = vector.broadcast %17 : f32 to vector<256xf32>
    %19 = arith.mulf %18, %7 : vector<256xf32>
    %20 = arith.addf %16, %19 : vector<256xf32>
    %c0_14 = arith.constant 0 : index
    %c3_15 = arith.constant 3 : index
    %21 = memref.load %arg1[%c0_14, %c3_15] : memref<4x4xf32, #tpu.memory_space<smem>>
    %22 = vector.broadcast %21 : f32 to vector<256xf32>
    %23 = arith.mulf %22, %9 : vector<256xf32>
    %24 = arith.addf %20, %23 : vector<256xf32>
    %c0_16 = arith.constant 0 : index
    %c0_17 = arith.constant 0 : index
    %25 = memref.load %arg2[%c0_16, %c0_17] : memref<2x4xf32, #tpu.memory_space<smem>>
    %26 = vector.broadcast %25 : f32 to vector<256xf32>
    %27 = arith.addf %24, %26 : vector<256xf32>
    %28 = math.tanh %27 : vector<256xf32>
    %c0_18 = arith.constant 0 : index
    %c0_19 = arith.constant 0 : index
    %29 = memref.load %arg3[%c0_18, %c0_19] : memref<2x4xf32, #tpu.memory_space<smem>>
    %30 = vector.broadcast %29 : f32 to vector<256xf32>
    %31 = arith.addf %24, %30 : vector<256xf32>
    %32 = math.tanh %31 : vector<256xf32>
    %cst = arith.constant 9.000000e+00 : f32
    %33 = vector.broadcast %cst : f32 to vector<256xf32>
    %34 = arith.mulf %33, %28 : vector<256xf32>
    %cst_20 = arith.constant 8.000000e+00 : f32
    %35 = vector.broadcast %cst_20 : f32 to vector<256xf32>
    %36 = arith.mulf %35, %32 : vector<256xf32>
    %37 = arith.subf %34, %36 : vector<256xf32>
    %38 = vector.broadcast %0 : f32 to vector<256xf32>
    %39 = arith.mulf %38, %3 : vector<256xf32>
    %40 = vector.broadcast %1 : f32 to vector<256xf32>
    %41 = arith.mulf %40, %37 : vector<256xf32>
    %42 = arith.addf %39, %41 : vector<256xf32>
    %c0_21 = arith.constant 0 : index
    %c0_22 = arith.constant 0 : index
    %43 = vector.load %arg5[%c0_21, %c0_22] : memref<8x256xf32, #tpu.memory_space<vmem>>, vector<1x256xf32>
    %44 = vector.shape_cast %43 : vector<1x256xf32> to vector<256xf32>
    %45 = vector.shape_cast %42 : vector<256xf32> to vector<1x256xf32>
    tpu.vector_store %arg5[%c0_21, %c0_22], %45 {strides = array<i32>} : memref<8x256xf32, #tpu.memory_space<vmem>>, vector<1x256xf32>,
    %c1_23 = arith.constant 1 : index
    %c0_24 = arith.constant 0 : index
    %46 = memref.load %arg1[%c1_23, %c0_24] : memref<4x4xf32, #tpu.memory_space<smem>>
    %47 = vector.broadcast %46 : f32 to vector<256xf32>
    %48 = arith.mulf %47, %3 : vector<256xf32>
    %c1_25 = arith.constant 1 : index
    %c1_26 = arith.constant 1 : index
    %49 = memref.load %arg1[%c1_25, %c1_26] : memref<4x4xf32, #tpu.memory_space<smem>>
    %50 = vector.broadcast %49 : f32 to vector<256xf32>
    %51 = arith.mulf %50, %5 : vector<256xf32>
    %52 = arith.addf %48, %51 : vector<256xf32>
    %c1_27 = arith.constant 1 : index
    %c2_28 = arith.constant 2 : index
    %53 = memref.load %arg1[%c1_27, %c2_28] : memref<4x4xf32, #tpu.memory_space<smem>>
    %54 = vector.broadcast %53 : f32 to vector<256xf32>
    %55 = arith.mulf %54, %7 : vector<256xf32>
    %56 = arith.addf %52, %55 : vector<256xf32>
    %c1_29 = arith.constant 1 : index
    %c3_30 = arith.constant 3 : index
    %57 = memref.load %arg1[%c1_29, %c3_30] : memref<4x4xf32, #tpu.memory_space<smem>>
    %58 = vector.broadcast %57 : f32 to vector<256xf32>
    %59 = arith.mulf %58, %9 : vector<256xf32>
    %60 = arith.addf %56, %59 : vector<256xf32>
    %c0_31 = arith.constant 0 : index
    %c1_32 = arith.constant 1 : index
    %61 = memref.load %arg2[%c0_31, %c1_32] : memref<2x4xf32, #tpu.memory_space<smem>>
    %62 = vector.broadcast %61 : f32 to vector<256xf32>
    %63 = arith.addf %60, %62 : vector<256xf32>
    %64 = math.tanh %63 : vector<256xf32>
    %c0_33 = arith.constant 0 : index
    %c1_34 = arith.constant 1 : index
    %65 = memref.load %arg3[%c0_33, %c1_34] : memref<2x4xf32, #tpu.memory_space<smem>>
    %66 = vector.broadcast %65 : f32 to vector<256xf32>
    %67 = arith.addf %60, %66 : vector<256xf32>
    %68 = math.tanh %67 : vector<256xf32>
    %cst_35 = arith.constant 9.000000e+00 : f32
    %69 = vector.broadcast %cst_35 : f32 to vector<256xf32>
    %70 = arith.mulf %69, %64 : vector<256xf32>
    %cst_36 = arith.constant 8.000000e+00 : f32
    %71 = vector.broadcast %cst_36 : f32 to vector<256xf32>
    %72 = arith.mulf %71, %68 : vector<256xf32>
    %73 = arith.subf %70, %72 : vector<256xf32>
    %74 = vector.broadcast %0 : f32 to vector<256xf32>
    %75 = arith.mulf %74, %5 : vector<256xf32>
    %76 = vector.broadcast %1 : f32 to vector<256xf32>
    %77 = arith.mulf %76, %73 : vector<256xf32>
    %78 = arith.addf %75, %77 : vector<256xf32>
    %c1_37 = arith.constant 1 : index
    %c0_38 = arith.constant 0 : index
    %79 = vector.load %arg5[%c1_37, %c0_38] : memref<8x256xf32, #tpu.memory_space<vmem>>, vector<1x256xf32>
    %80 = vector.shape_cast %79 : vector<1x256xf32> to vector<256xf32>
    %81 = vector.shape_cast %78 : vector<256xf32> to vector<1x256xf32>
    tpu.vector_store %arg5[%c1_37, %c0_38], %81 {strides = array<i32>} : memref<8x256xf32, #tpu.memory_space<vmem>>, vector<1x256xf32>,
    %c2_39 = arith.constant 2 : index
    %c0_40 = arith.constant 0 : index
    %82 = memref.load %arg1[%c2_39, %c0_40] : memref<4x4xf32, #tpu.memory_space<smem>>
    %83 = vector.broadcast %82 : f32 to vector<256xf32>
    %84 = arith.mulf %83, %3 : vector<256xf32>
    %c2_41 = arith.constant 2 : index
    %c1_42 = arith.constant 1 : index
    %85 = memref.load %arg1[%c2_41, %c1_42] : memref<4x4xf32, #tpu.memory_space<smem>>
    %86 = vector.broadcast %85 : f32 to vector<256xf32>
    %87 = arith.mulf %86, %5 : vector<256xf32>
    %88 = arith.addf %84, %87 : vector<256xf32>
    %c2_43 = arith.constant 2 : index
    %c2_44 = arith.constant 2 : index
    %89 = memref.load %arg1[%c2_43, %c2_44] : memref<4x4xf32, #tpu.memory_space<smem>>
    %90 = vector.broadcast %89 : f32 to vector<256xf32>
    %91 = arith.mulf %90, %7 : vector<256xf32>
    %92 = arith.addf %88, %91 : vector<256xf32>
    %c2_45 = arith.constant 2 : index
    %c3_46 = arith.constant 3 : index
    %93 = memref.load %arg1[%c2_45, %c3_46] : memref<4x4xf32, #tpu.memory_space<smem>>
    %94 = vector.broadcast %93 : f32 to vector<256xf32>
    %95 = arith.mulf %94, %9 : vector<256xf32>
    %96 = arith.addf %92, %95 : vector<256xf32>
    %c0_47 = arith.constant 0 : index
    %c2_48 = arith.constant 2 : index
    %97 = memref.load %arg2[%c0_47, %c2_48] : memref<2x4xf32, #tpu.memory_space<smem>>
    %98 = vector.broadcast %97 : f32 to vector<256xf32>
    %99 = arith.addf %96, %98 : vector<256xf32>
    %100 = math.tanh %99 : vector<256xf32>
    %c0_49 = arith.constant 0 : index
    %c2_50 = arith.constant 2 : index
    %101 = memref.load %arg3[%c0_49, %c2_50] : memref<2x4xf32, #tpu.memory_space<smem>>
    %102 = vector.broadcast %101 : f32 to vector<256xf32>
    %103 = arith.addf %96, %102 : vector<256xf32>
    %104 = math.tanh %103 : vector<256xf32>
    %cst_51 = arith.constant 9.000000e+00 : f32
    %105 = vector.broadcast %cst_51 : f32 to vector<256xf32>
    %106 = arith.mulf %105, %100 : vector<256xf32>
    %cst_52 = arith.constant 8.000000e+00 : f32
    %107 = vector.broadcast %cst_52 : f32 to vector<256xf32>
    %108 = arith.mulf %107, %104 : vector<256xf32>
    %109 = arith.subf %106, %108 : vector<256xf32>
    %110 = vector.broadcast %0 : f32 to vector<256xf32>
    %111 = arith.mulf %110, %7 : vector<256xf32>
    %112 = vector.broadcast %1 : f32 to vector<256xf32>
    %113 = arith.mulf %112, %109 : vector<256xf32>
    %114 = arith.addf %111, %113 : vector<256xf32>
    %c2_53 = arith.constant 2 : index
    %c0_54 = arith.constant 0 : index
    %115 = vector.load %arg5[%c2_53, %c0_54] : memref<8x256xf32, #tpu.memory_space<vmem>>, vector<1x256xf32>
    %116 = vector.shape_cast %115 : vector<1x256xf32> to vector<256xf32>
    %117 = vector.shape_cast %114 : vector<256xf32> to vector<1x256xf32>
    tpu.vector_store %arg5[%c2_53, %c0_54], %117 {strides = array<i32>} : memref<8x256xf32, #tpu.memory_space<vmem>>, vector<1x256xf32>,
    %c3_55 = arith.constant 3 : index
    %c0_56 = arith.constant 0 : index
    %118 = memref.load %arg1[%c3_55, %c0_56] : memref<4x4xf32, #tpu.memory_space<smem>>
    %119 = vector.broadcast %118 : f32 to vector<256xf32>
    %120 = arith.mulf %119, %3 : vector<256xf32>
    %c3_57 = arith.constant 3 : index
    %c1_58 = arith.constant 1 : index
    %121 = memref.load %arg1[%c3_57, %c1_58] : memref<4x4xf32, #tpu.memory_space<smem>>
    %122 = vector.broadcast %121 : f32 to vector<256xf32>
    %123 = arith.mulf %122, %5 : vector<256xf32>
    %124 = arith.addf %120, %123 : vector<256xf32>
    %c3_59 = arith.constant 3 : index
    %c2_60 = arith.constant 2 : index
    %125 = memref.load %arg1[%c3_59, %c2_60] : memref<4x4xf32, #tpu.memory_space<smem>>
    %126 = vector.broadcast %125 : f32 to vector<256xf32>
    %127 = arith.mulf %126, %7 : vector<256xf32>
    %128 = arith.addf %124, %127 : vector<256xf32>
    %c3_61 = arith.constant 3 : index
    %c3_62 = arith.constant 3 : index
    %129 = memref.load %arg1[%c3_61, %c3_62] : memref<4x4xf32, #tpu.memory_space<smem>>
    %130 = vector.broadcast %129 : f32 to vector<256xf32>
    %131 = arith.mulf %130, %9 : vector<256xf32>
    %132 = arith.addf %128, %131 : vector<256xf32>
    %c0_63 = arith.constant 0 : index
    %c3_64 = arith.constant 3 : index
    %133 = memref.load %arg2[%c0_63, %c3_64] : memref<2x4xf32, #tpu.memory_space<smem>>
    %134 = vector.broadcast %133 : f32 to vector<256xf32>
    %135 = arith.addf %132, %134 : vector<256xf32>
    %136 = math.tanh %135 : vector<256xf32>
    %c0_65 = arith.constant 0 : index
    %c3_66 = arith.constant 3 : index
    %137 = memref.load %arg3[%c0_65, %c3_66] : memref<2x4xf32, #tpu.memory_space<smem>>
    %138 = vector.broadcast %137 : f32 to vector<256xf32>
    %139 = arith.addf %132, %138 : vector<256xf32>
    %140 = math.tanh %139 : vector<256xf32>
    %cst_67 = arith.constant 9.000000e+00 : f32
    %141 = vector.broadcast %cst_67 : f32 to vector<256xf32>
    %142 = arith.mulf %141, %136 : vector<256xf32>
    %cst_68 = arith.constant 8.000000e+00 : f32
    %143 = vector.broadcast %cst_68 : f32 to vector<256xf32>
    %144 = arith.mulf %143, %140 : vector<256xf32>
    %145 = arith.subf %142, %144 : vector<256xf32>
    %146 = vector.broadcast %0 : f32 to vector<256xf32>
    %147 = arith.mulf %146, %9 : vector<256xf32>
    %148 = vector.broadcast %1 : f32 to vector<256xf32>
    %149 = arith.mulf %148, %145 : vector<256xf32>
    %150 = arith.addf %147, %149 : vector<256xf32>
    %c3_69 = arith.constant 3 : index
    %c0_70 = arith.constant 0 : index
    %151 = vector.load %arg5[%c3_69, %c0_70] : memref<8x256xf32, #tpu.memory_space<vmem>>, vector<1x256xf32>
    %152 = vector.shape_cast %151 : vector<1x256xf32> to vector<256xf32>
    %153 = vector.shape_cast %150 : vector<256xf32> to vector<1x256xf32>
    tpu.vector_store %arg5[%c3_69, %c0_70], %153 {strides = array<i32>} : memref<8x256xf32, #tpu.memory_space<vmem>>, vector<1x256xf32>,
    %c1_71 = arith.constant 1 : index
    %c0_72 = arith.constant 0 : index
    %154 = memref.load %arg4[%c1_71, %c0_72] : memref<2x2xf32, #tpu.memory_space<smem>>
    %c1_73 = arith.constant 1 : index
    %c1_74 = arith.constant 1 : index
    %155 = memref.load %arg4[%c1_73, %c1_74] : memref<2x2xf32, #tpu.memory_space<smem>>
    %c4 = arith.constant 4 : index
    %c0_75 = arith.constant 0 : index
    %156 = vector.load %arg0[%c4, %c0_75] : memref<8x256xf32, #tpu.memory_space<vmem>>, vector<1x256xf32>
    %157 = vector.shape_cast %156 : vector<1x256xf32> to vector<256xf32>
    %c5 = arith.constant 5 : index
    %c0_76 = arith.constant 0 : index
    %158 = vector.load %arg0[%c5, %c0_76] : memref<8x256xf32, #tpu.memory_space<vmem>>, vector<1x256xf32>
    %159 = vector.shape_cast %158 : vector<1x256xf32> to vector<256xf32>
    %c6 = arith.constant 6 : index
    %c0_77 = arith.constant 0 : index
    %160 = vector.load %arg0[%c6, %c0_77] : memref<8x256xf32, #tpu.memory_space<vmem>>, vector<1x256xf32>
    %161 = vector.shape_cast %160 : vector<1x256xf32> to vector<256xf32>
    %c7 = arith.constant 7 : index
    %c0_78 = arith.constant 0 : index
    %162 = vector.load %arg0[%c7, %c0_78] : memref<8x256xf32, #tpu.memory_space<vmem>>, vector<1x256xf32>
    %163 = vector.shape_cast %162 : vector<1x256xf32> to vector<256xf32>
    %c0_79 = arith.constant 0 : index
    %c0_80 = arith.constant 0 : index
    %164 = memref.load %arg1[%c0_79, %c0_80] : memref<4x4xf32, #tpu.memory_space<smem>>
    %165 = vector.broadcast %164 : f32 to vector<256xf32>
    %166 = arith.mulf %165, %157 : vector<256xf32>
    %c0_81 = arith.constant 0 : index
    %c1_82 = arith.constant 1 : index
    %167 = memref.load %arg1[%c0_81, %c1_82] : memref<4x4xf32, #tpu.memory_space<smem>>
    %168 = vector.broadcast %167 : f32 to vector<256xf32>
    %169 = arith.mulf %168, %159 : vector<256xf32>
    %170 = arith.addf %166, %169 : vector<256xf32>
    %c0_83 = arith.constant 0 : index
    %c2_84 = arith.constant 2 : index
    %171 = memref.load %arg1[%c0_83, %c2_84] : memref<4x4xf32, #tpu.memory_space<smem>>
    %172 = vector.broadcast %171 : f32 to vector<256xf32>
    %173 = arith.mulf %172, %161 : vector<256xf32>
    %174 = arith.addf %170, %173 : vector<256xf32>
    %c0_85 = arith.constant 0 : index
    %c3_86 = arith.constant 3 : index
    %175 = memref.load %arg1[%c0_85, %c3_86] : memref<4x4xf32, #tpu.memory_space<smem>>
    %176 = vector.broadcast %175 : f32 to vector<256xf32>
    %177 = arith.mulf %176, %163 : vector<256xf32>
    %178 = arith.addf %174, %177 : vector<256xf32>
    %c1_87 = arith.constant 1 : index
    %c0_88 = arith.constant 0 : index
    %179 = memref.load %arg2[%c1_87, %c0_88] : memref<2x4xf32, #tpu.memory_space<smem>>
    %180 = vector.broadcast %179 : f32 to vector<256xf32>
    %181 = arith.addf %178, %180 : vector<256xf32>
    %182 = math.tanh %181 : vector<256xf32>
    %c1_89 = arith.constant 1 : index
    %c0_90 = arith.constant 0 : index
    %183 = memref.load %arg3[%c1_89, %c0_90] : memref<2x4xf32, #tpu.memory_space<smem>>
    %184 = vector.broadcast %183 : f32 to vector<256xf32>
    %185 = arith.addf %178, %184 : vector<256xf32>
    %186 = math.tanh %185 : vector<256xf32>
    %cst_91 = arith.constant 9.000000e+00 : f32
    %187 = vector.broadcast %cst_91 : f32 to vector<256xf32>
    %188 = arith.mulf %187, %182 : vector<256xf32>
    %cst_92 = arith.constant 8.000000e+00 : f32
    %189 = vector.broadcast %cst_92 : f32 to vector<256xf32>
    %190 = arith.mulf %189, %186 : vector<256xf32>
    %191 = arith.subf %188, %190 : vector<256xf32>
    %192 = vector.broadcast %154 : f32 to vector<256xf32>
    %193 = arith.mulf %192, %157 : vector<256xf32>
    %194 = vector.broadcast %155 : f32 to vector<256xf32>
    %195 = arith.mulf %194, %191 : vector<256xf32>
    %196 = arith.addf %193, %195 : vector<256xf32>
    %c4_93 = arith.constant 4 : index
    %c0_94 = arith.constant 0 : index
    %197 = vector.load %arg5[%c4_93, %c0_94] : memref<8x256xf32, #tpu.memory_space<vmem>>, vector<1x256xf32>
    %198 = vector.shape_cast %197 : vector<1x256xf32> to vector<256xf32>
    %199 = vector.shape_cast %196 : vector<256xf32> to vector<1x256xf32>
    tpu.vector_store %arg5[%c4_93, %c0_94], %199 {strides = array<i32>} : memref<8x256xf32, #tpu.memory_space<vmem>>, vector<1x256xf32>,
    %c1_95 = arith.constant 1 : index
    %c0_96 = arith.constant 0 : index
    %200 = memref.load %arg1[%c1_95, %c0_96] : memref<4x4xf32, #tpu.memory_space<smem>>
    %201 = vector.broadcast %200 : f32 to vector<256xf32>
    %202 = arith.mulf %201, %157 : vector<256xf32>
    %c1_97 = arith.constant 1 : index
    %c1_98 = arith.constant 1 : index
    %203 = memref.load %arg1[%c1_97, %c1_98] : memref<4x4xf32, #tpu.memory_space<smem>>
    %204 = vector.broadcast %203 : f32 to vector<256xf32>
    %205 = arith.mulf %204, %159 : vector<256xf32>
    %206 = arith.addf %202, %205 : vector<256xf32>
    %c1_99 = arith.constant 1 : index
    %c2_100 = arith.constant 2 : index
    %207 = memref.load %arg1[%c1_99, %c2_100] : memref<4x4xf32, #tpu.memory_space<smem>>
    %208 = vector.broadcast %207 : f32 to vector<256xf32>
    %209 = arith.mulf %208, %161 : vector<256xf32>
    %210 = arith.addf %206, %209 : vector<256xf32>
    %c1_101 = arith.constant 1 : index
    %c3_102 = arith.constant 3 : index
    %211 = memref.load %arg1[%c1_101, %c3_102] : memref<4x4xf32, #tpu.memory_space<smem>>
    %212 = vector.broadcast %211 : f32 to vector<256xf32>
    %213 = arith.mulf %212, %163 : vector<256xf32>
    %214 = arith.addf %210, %213 : vector<256xf32>
    %c1_103 = arith.constant 1 : index
    %c1_104 = arith.constant 1 : index
    %215 = memref.load %arg2[%c1_103, %c1_104] : memref<2x4xf32, #tpu.memory_space<smem>>
    %216 = vector.broadcast %215 : f32 to vector<256xf32>
    %217 = arith.addf %214, %216 : vector<256xf32>
    %218 = math.tanh %217 : vector<256xf32>
    %c1_105 = arith.constant 1 : index
    %c1_106 = arith.constant 1 : index
    %219 = memref.load %arg3[%c1_105, %c1_106] : memref<2x4xf32, #tpu.memory_space<smem>>
    %220 = vector.broadcast %219 : f32 to vector<256xf32>
    %221 = arith.addf %214, %220 : vector<256xf32>
    %222 = math.tanh %221 : vector<256xf32>
    %cst_107 = arith.constant 9.000000e+00 : f32
    %223 = vector.broadcast %cst_107 : f32 to vector<256xf32>
    %224 = arith.mulf %223, %218 : vector<256xf32>
    %cst_108 = arith.constant 8.000000e+00 : f32
    %225 = vector.broadcast %cst_108 : f32 to vector<256xf32>
    %226 = arith.mulf %225, %222 : vector<256xf32>
    %227 = arith.subf %224, %226 : vector<256xf32>
    %228 = vector.broadcast %154 : f32 to vector<256xf32>
    %229 = arith.mulf %228, %159 : vector<256xf32>
    %230 = vector.broadcast %155 : f32 to vector<256xf32>
    %231 = arith.mulf %230, %227 : vector<256xf32>
    %232 = arith.addf %229, %231 : vector<256xf32>
    %c5_109 = arith.constant 5 : index
    %c0_110 = arith.constant 0 : index
    %233 = vector.load %arg5[%c5_109, %c0_110] : memref<8x256xf32, #tpu.memory_space<vmem>>, vector<1x256xf32>
    %234 = vector.shape_cast %233 : vector<1x256xf32> to vector<256xf32>
    %235 = vector.shape_cast %232 : vector<256xf32> to vector<1x256xf32>
    tpu.vector_store %arg5[%c5_109, %c0_110], %235 {strides = array<i32>} : memref<8x256xf32, #tpu.memory_space<vmem>>, vector<1x256xf32>,
    %c2_111 = arith.constant 2 : index
    %c0_112 = arith.constant 0 : index
    %236 = memref.load %arg1[%c2_111, %c0_112] : memref<4x4xf32, #tpu.memory_space<smem>>
    %237 = vector.broadcast %236 : f32 to vector<256xf32>
    %238 = arith.mulf %237, %157 : vector<256xf32>
    %c2_113 = arith.constant 2 : index
    %c1_114 = arith.constant 1 : index
    %239 = memref.load %arg1[%c2_113, %c1_114] : memref<4x4xf32, #tpu.memory_space<smem>>
    %240 = vector.broadcast %239 : f32 to vector<256xf32>
    %241 = arith.mulf %240, %159 : vector<256xf32>
    %242 = arith.addf %238, %241 : vector<256xf32>
    %c2_115 = arith.constant 2 : index
    %c2_116 = arith.constant 2 : index
    %243 = memref.load %arg1[%c2_115, %c2_116] : memref<4x4xf32, #tpu.memory_space<smem>>
    %244 = vector.broadcast %243 : f32 to vector<256xf32>
    %245 = arith.mulf %244, %161 : vector<256xf32>
    %246 = arith.addf %242, %245 : vector<256xf32>
    %c2_117 = arith.constant 2 : index
    %c3_118 = arith.constant 3 : index
    %247 = memref.load %arg1[%c2_117, %c3_118] : memref<4x4xf32, #tpu.memory_space<smem>>
    %248 = vector.broadcast %247 : f32 to vector<256xf32>
    %249 = arith.mulf %248, %163 : vector<256xf32>
    %250 = arith.addf %246, %249 : vector<256xf32>
    %c1_119 = arith.constant 1 : index
    %c2_120 = arith.constant 2 : index
    %251 = memref.load %arg2[%c1_119, %c2_120] : memref<2x4xf32, #tpu.memory_space<smem>>
    %252 = vector.broadcast %251 : f32 to vector<256xf32>
    %253 = arith.addf %250, %252 : vector<256xf32>
    %254 = math.tanh %253 : vector<256xf32>
    %c1_121 = arith.constant 1 : index
    %c2_122 = arith.constant 2 : index
    %255 = memref.load %arg3[%c1_121, %c2_122] : memref<2x4xf32, #tpu.memory_space<smem>>
    %256 = vector.broadcast %255 : f32 to vector<256xf32>
    %257 = arith.addf %250, %256 : vector<256xf32>
    %258 = math.tanh %257 : vector<256xf32>
    %cst_123 = arith.constant 9.000000e+00 : f32
    %259 = vector.broadcast %cst_123 : f32 to vector<256xf32>
    %260 = arith.mulf %259, %254 : vector<256xf32>
    %cst_124 = arith.constant 8.000000e+00 : f32
    %261 = vector.broadcast %cst_124 : f32 to vector<256xf32>
    %262 = arith.mulf %261, %258 : vector<256xf32>
    %263 = arith.subf %260, %262 : vector<256xf32>
    %264 = vector.broadcast %154 : f32 to vector<256xf32>
    %265 = arith.mulf %264, %161 : vector<256xf32>
    %266 = vector.broadcast %155 : f32 to vector<256xf32>
    %267 = arith.mulf %266, %263 : vector<256xf32>
    %268 = arith.addf %265, %267 : vector<256xf32>
    %c6_125 = arith.constant 6 : index
    %c0_126 = arith.constant 0 : index
    %269 = vector.load %arg5[%c6_125, %c0_126] : memref<8x256xf32, #tpu.memory_space<vmem>>, vector<1x256xf32>
    %270 = vector.shape_cast %269 : vector<1x256xf32> to vector<256xf32>
    %271 = vector.shape_cast %268 : vector<256xf32> to vector<1x256xf32>
    tpu.vector_store %arg5[%c6_125, %c0_126], %271 {strides = array<i32>} : memref<8x256xf32, #tpu.memory_space<vmem>>, vector<1x256xf32>,
    %c3_127 = arith.constant 3 : index
    %c0_128 = arith.constant 0 : index
    %272 = memref.load %arg1[%c3_127, %c0_128] : memref<4x4xf32, #tpu.memory_space<smem>>
    %273 = vector.broadcast %272 : f32 to vector<256xf32>
    %274 = arith.mulf %273, %157 : vector<256xf32>
    %c3_129 = arith.constant 3 : index
    %c1_130 = arith.constant 1 : index
    %275 = memref.load %arg1[%c3_129, %c1_130] : memref<4x4xf32, #tpu.memory_space<smem>>
    %276 = vector.broadcast %275 : f32 to vector<256xf32>
    %277 = arith.mulf %276, %159 : vector<256xf32>
    %278 = arith.addf %274, %277 : vector<256xf32>
    %c3_131 = arith.constant 3 : index
    %c2_132 = arith.constant 2 : index
    %279 = memref.load %arg1[%c3_131, %c2_132] : memref<4x4xf32, #tpu.memory_space<smem>>
    %280 = vector.broadcast %279 : f32 to vector<256xf32>
    %281 = arith.mulf %280, %161 : vector<256xf32>
    %282 = arith.addf %278, %281 : vector<256xf32>
    %c3_133 = arith.constant 3 : index
    %c3_134 = arith.constant 3 : index
    %283 = memref.load %arg1[%c3_133, %c3_134] : memref<4x4xf32, #tpu.memory_space<smem>>
    %284 = vector.broadcast %283 : f32 to vector<256xf32>
    %285 = arith.mulf %284, %163 : vector<256xf32>
    %286 = arith.addf %282, %285 : vector<256xf32>
    %c1_135 = arith.constant 1 : index
    %c3_136 = arith.constant 3 : index
    %287 = memref.load %arg2[%c1_135, %c3_136] : memref<2x4xf32, #tpu.memory_space<smem>>
    %288 = vector.broadcast %287 : f32 to vector<256xf32>
    %289 = arith.addf %286, %288 : vector<256xf32>
    %290 = math.tanh %289 : vector<256xf32>
    %c1_137 = arith.constant 1 : index
    %c3_138 = arith.constant 3 : index
    %291 = memref.load %arg3[%c1_137, %c3_138] : memref<2x4xf32, #tpu.memory_space<smem>>
    %292 = vector.broadcast %291 : f32 to vector<256xf32>
    %293 = arith.addf %286, %292 : vector<256xf32>
    %294 = math.tanh %293 : vector<256xf32>
    %cst_139 = arith.constant 9.000000e+00 : f32
    %295 = vector.broadcast %cst_139 : f32 to vector<256xf32>
    %296 = arith.mulf %295, %290 : vector<256xf32>
    %cst_140 = arith.constant 8.000000e+00 : f32
    %297 = vector.broadcast %cst_140 : f32 to vector<256xf32>
    %298 = arith.mulf %297, %294 : vector<256xf32>
    %299 = arith.subf %296, %298 : vector<256xf32>
    %300 = vector.broadcast %154 : f32 to vector<256xf32>
    %301 = arith.mulf %300, %163 : vector<256xf32>
    %302 = vector.broadcast %155 : f32 to vector<256xf32>
    %303 = arith.mulf %302, %299 : vector<256xf32>
    %304 = arith.addf %301, %303 : vector<256xf32>
    %c7_141 = arith.constant 7 : index
    %c0_142 = arith.constant 0 : index
    %305 = vector.load %arg5[%c7_141, %c0_142] : memref<8x256xf32, #tpu.memory_space<vmem>>, vector<1x256xf32>
    %306 = vector.shape_cast %305 : vector<1x256xf32> to vector<256xf32>
    %307 = vector.shape_cast %304 : vector<256xf32> to vector<1x256xf32>
    tpu.vector_store %arg5[%c7_141, %c0_142], %307 {strides = array<i32>} : memref<8x256xf32, #tpu.memory_space<vmem>>, vector<1x256xf32>,
    return
  }
}

</mosaic_0001>

<llo_original>
// kernel: tpu_custom_call.1
$region0: #{tpu_custom_call.1}
  #allocation0 [shape = 'u32[]', space=smem, size = 0x4, offset = 0x4, fixed_abs, tag = 'smem constant byte address 0x4 - core index']
  #allocation1 [shape = 'u32[144,128]{1,0:T(1,128)}', space=vmem, size = 0x12000, scoped, tag = 'internal scratch']
  %s0 = inlined_call_operand.hbm [shape: f32[8,256], index: 0, kind: input, shape index: {}]
  %s1 = inlined_call_operand.hbm [shape: f32[4,4], index: 1, kind: input, shape index: {}]
  %s2 = inlined_call_operand.vmem [shape: f32[2,4], index: 2, kind: input, shape index: {}]
  %s3 = inlined_call_operand.vmem [shape: f32[2,4], index: 3, kind: input, shape index: {}]
  %s4 = inlined_call_operand.vmem [shape: f32[2,2], index: 4, kind: input, shape index: {}]
  %s5 = inlined_call_operand.hbm [shape: f32[8,256], index: 5, kind: output, shape index: {}]
  %s6 = sld [smem:[#allocation0]]
  $region50: #{tpu_custom_call.1} parent=0
    _
  %s8 = ssub.s32 1, %s6
  %s9 = scalar_select 0, %s8, %s6
  $region1: #{tpu_custom_call.1} parent=0
    #allocation2 [shape = 'u8[8192]{0}', space=vmem, size = 0x2000, scoped, tag = 'input window, operand 0, single buffered']
    #allocation3 [shape = 's32[1]{0}', space=sflag, size = 0x4, scoped, tag = 'scoped memory for tpu_custom_call.1']
    #allocation4 [shape = 's32[1]{0}', space=sflag, size = 0x4, scoped, tag = 'scoped memory for tpu_custom_call.1']
    #allocation5 [shape = 's32[1]{0}', space=sflag, size = 0x4, scoped, tag = 'scoped memory for tpu_custom_call.1']
    #allocation6 [shape = 's32[1]{0}', space=sflag, size = 0x4, scoped, tag = 'scoped memory for tpu_custom_call.1']
    #allocation7 [shape = 'u8[2048]{0}', space=smem, size = 0x800, scoped, tag = 'input window, operand 1, single buffered']
    #allocation8 [shape = 'u8[1024]{0}', space=smem, size = 0x400, scoped, tag = 'input window, operand 2, single buffered']
    #allocation9 [shape = 'u8[1024]{0}', space=smem, size = 0x400, scoped, tag = 'input window, operand 3, single buffered']
    #allocation10 [shape = 's32[1]{0}', space=sflag, size = 0x4, scoped, tag = 'scoped memory for tpu_custom_call.1']
    #allocation11 [shape = 'u8[1024]{0}', space=smem, size = 0x400, scoped, tag = 'input window, operand 4, single buffered']
    #allocation12 [shape = 'u8[8192]{0}', space=vmem, size = 0x2000, scoped, tag = 'output window, operand 0, single buffered']
    %10 = vsyncpa [#allocation3], 0
    %11 = vsyncpa [#allocation5], 0
    %12 = vsyncpa [#allocation6], 0
    %13 = vsyncpa [#allocation10], 0
    %14 = vsyncpa [#allocation4], 0
    // Predicated region
    $region2: #{tpu_custom_call.1} parent=1 // pred_check
      _
    $region3: #{tpu_custom_call.1} parent=1 // pred_check_branch
      %16 = sbr.rel (0) target = $region5
    $region4: #{tpu_custom_call.1} parent=1 // pred_region
      %s18 = ssub.s32 256, 256
      %19 = vsyncadd [#allocation3], %s18
      %s21 = sshll.u32 [#allocation2], 4
      %s22 = int_to_ptr.vmem [resolvable:$true] %s21
      %24 = dma.hbm_to_vmem [thread:$0]  %s0, 256, %s22, [#allocation3]
    $region5: #{tpu_custom_call.1} parent=1 // pred_fallthru
      _
    // Predicated region
    $region6: #{tpu_custom_call.1} parent=1 // pred_check
      _
    $region7: #{tpu_custom_call.1} parent=1 // pred_check_branch
      %26 = sbr.rel (0) target = $region9
    $region8: #{tpu_custom_call.1} parent=1 // pred_region
      %s28 = ssub.s32 64, 64
      %29 = vsyncadd [#allocation5], %s28
      %32 = dma.hbm_to_smem %s1, 64, [#allocation7], [#allocation5]
    $region9: #{tpu_custom_call.1} parent=1 // pred_fallthru
      _
    // Predicated region
    $region10: #{tpu_custom_call.1} parent=1 // pred_check
      _
    $region11: #{tpu_custom_call.1} parent=1 // pred_check_branch
      %34 = sbr.rel (0) target = $region13
    $region12: #{tpu_custom_call.1} parent=1 // pred_region
      %s36 = ssub.s32 32, 32
      %37 = vsyncadd [#allocation6], %s36
      %s39 = sshll.u32 %s2, 4
      %s40 = int_to_ptr.vmem [resolvable:$true] %s39
      %42 = dma.vmem_to_smem %s40, 32, [#allocation8], [#allocation6]
    $region13: #{tpu_custom_call.1} parent=1 // pred_fallthru
      _
    // Predicated region
    $region14: #{tpu_custom_call.1} parent=1 // pred_check
      _
    $region15: #{tpu_custom_call.1} parent=1 // pred_check_branch
      %44 = sbr.rel (0) target = $region17
    $region16: #{tpu_custom_call.1} parent=1 // pred_region
      %s46 = ssub.s32 32, 32
      %47 = vsyncadd [#allocation10], %s46
      %s49 = sshll.u32 %s3, 4
      %s50 = int_to_ptr.vmem [resolvable:$true] %s49
      %52 = dma.vmem_to_smem %s50, 32, [#allocation9], [#allocation10]
    $region17: #{tpu_custom_call.1} parent=1 // pred_fallthru
      _
    // Predicated region
    $region18: #{tpu_custom_call.1} parent=1 // pred_check
      _
    $region19: #{tpu_custom_call.1} parent=1 // pred_check_branch
      %54 = sbr.rel (0) target = $region21
    $region20: #{tpu_custom_call.1} parent=1 // pred_region
      %s56 = ssub.s32 32, 32
      %57 = vsyncadd [#allocation10], %s56
      %s59 = sshll.u32 %s4, 4
      %s60 = int_to_ptr.vmem [resolvable:$true] %s59
      %62 = dma.vmem_to_smem %s60, 32, [#allocation11], [#allocation10]
    $region21: #{tpu_custom_call.1} parent=1 // pred_fallthru
      _
    // Predicated region
    $region22: #{tpu_custom_call.1} parent=1 // pred_check
      _
    $region23: #{tpu_custom_call.1} parent=1 // pred_check_branch
      %64 = sbr.rel (0) target = $region25
    $region24: #{tpu_custom_call.1} parent=1 // pred_region
      %65 = dma.done [#allocation3], 256
    $region25: #{tpu_custom_call.1} parent=1 // pred_fallthru
      _
    // Predicated region
    $region26: #{tpu_custom_call.1} parent=1 // pred_check
      _
    $region27: #{tpu_custom_call.1} parent=1 // pred_check_branch
      %67 = sbr.rel (0) target = $region29
    $region28: #{tpu_custom_call.1} parent=1 // pred_region
      %68 = dma.done [#allocation5], 64
    $region29: #{tpu_custom_call.1} parent=1 // pred_fallthru
      _
    // Predicated region
    $region30: #{tpu_custom_call.1} parent=1 // pred_check
      _
    $region31: #{tpu_custom_call.1} parent=1 // pred_check_branch
      %70 = sbr.rel (0) target = $region33
    $region32: #{tpu_custom_call.1} parent=1 // pred_region
      %71 = dma.done [#allocation6], 32
    $region33: #{tpu_custom_call.1} parent=1 // pred_fallthru
      _
    // Predicated region
    $region34: #{tpu_custom_call.1} parent=1 // pred_check
      _
    $region35: #{tpu_custom_call.1} parent=1 // pred_check_branch
      %73 = sbr.rel (0) target = $region37
    $region36: #{tpu_custom_call.1} parent=1 // pred_region
      %74 = dma.done [#allocation10], 32
    $region37: #{tpu_custom_call.1} parent=1 // pred_fallthru
      _
    // Predicated region
    $region38: #{tpu_custom_call.1} parent=1 // pred_check
      _
    $region39: #{tpu_custom_call.1} parent=1 // pred_check_branch
      %76 = sbr.rel (0) target = $region41
    $region40: #{tpu_custom_call.1} parent=1 // pred_region
      %77 = dma.done [#allocation10], 32
    $region41: #{tpu_custom_call.1} parent=1 // pred_fallthru
      _
    %78 = sfence
    %s79 = sld [smem:[#allocation11]]
    %s80 = sld [smem:[#allocation11 + $0x1]]
    %v81 = vld [vmem:[#allocation2] ss:$8 sm:$0x3]
    %s82 = scalar_lea.vmem [#allocation2], 1
    %v83 = vld [vmem:[%s82] ss:$8 sm:$0x3]
    %s84 = scalar_lea.vmem [#allocation2], 2
    %v85 = vld [vmem:[%s84] ss:$8 sm:$0x3]
    %s86 = scalar_lea.vmem [#allocation2], 3
    %v87 = vld [vmem:[%s86] ss:$8 sm:$0x3]
    %s88 = sld [smem:[#allocation7]]
    %v89 = vstv %s88
    %v90 = vmul.f32 %v89, %v81
    %s91 = sld [smem:[#allocation7 + $0x1]]
    %v92 = vstv %s91
    %v93 = vmul.f32 %v92, %v83
    %v94 = vadd.f32 %v90, %v93
    %s95 = sld [smem:[#allocation7 + $0x2]]
    %v96 = vstv %s95
    %v97 = vmul.f32 %v96, %v85
    %v98 = vadd.f32 %v94, %v97
    %s99 = sld [smem:[#allocation7 + $0x3]]
    %v100 = vstv %s99
    %v101 = vmul.f32 %v100, %v87
    %v102 = vadd.f32 %v98, %v101
    %s103 = sld [smem:[#allocation8]]
    %v104 = vstv %s103
    %v105 = vadd.f32 %v102, %v104
    %v106 = vtanh.pop %v105
    %s107 = sld [smem:[#allocation9]]
    %v108 = vstv %s107
    %v109 = vadd.f32 %v102, %v108
    %v110 = vtanh.pop %v109
    %v111 = vmul.f32 %v106, 9.0
    %v112 = vmul.f32 %v110, 8.0
    %v113 = vsub.f32 %v111, %v112
    %v114 = vstv %s79
    %v115 = vmul.f32 %v114, %v81
    %v116 = vstv %s80
    %v117 = vmul.f32 %v116, %v113
    %v118 = vadd.f32 %v115, %v117
    %v119 = vlaneseq
    %vm120 = vcmp.ge.s32.totalorder %v119, 0
    %vm121 = vcmp.lt.s32.totalorder %v119, 256
    %vm122 = vmand %vm120, %vm121
    %123 = vst.msk [vmem:[#allocation12] ss:$8 sm:$0x3] %vm122, %v118
    %124 = vst.msk [vmem:[#allocation12] ss:$8 sm:$0x0] %vm122, %v118
    %s125 = sld [smem:[#allocation7 + $0x80]]
    %v126 = vstv %s125
    %v127 = vmul.f32 %v126, %v81
    %s128 = sld [smem:[#allocation7 + $0x81]]
    %v129 = vstv %s128
    %v130 = vmul.f32 %v129, %v83
    %v131 = vadd.f32 %v127, %v130
    %s132 = sld [smem:[#allocation7 + $0x82]]
    %v133 = vstv %s132
    %v134 = vmul.f32 %v133, %v85
    %v135 = vadd.f32 %v131, %v134
    %s136 = sld [smem:[#allocation7 + $0x83]]
    %v137 = vstv %s136
    %v138 = vmul.f32 %v137, %v87
    %v139 = vadd.f32 %v135, %v138
    %s140 = sld [smem:[#allocation8 + $0x1]]
    %v141 = vstv %s140
    %v142 = vadd.f32 %v139, %v141
    %v143 = vtanh.pop %v142
    %s144 = sld [smem:[#allocation9 + $0x1]]
    %v145 = vstv %s144
    %v146 = vadd.f32 %v139, %v145
    %v147 = vtanh.pop %v146
    %v148 = vmul.f32 %v143, 9.0
    %v149 = vmul.f32 %v147, 8.0
    %v150 = vsub.f32 %v148, %v149
    %v151 = vmul.f32 %v114, %v83
    %v152 = vmul.f32 %v116, %v150
    %v153 = vadd.f32 %v151, %v152
    %s154 = scalar_lea.vmem [#allocation12], 1
    %155 = vst.msk [vmem:[%s154] ss:$8 sm:$0x3] %vm122, %v153
    %156 = vst.msk [vmem:[%s154] ss:$8 sm:$0x0] %vm122, %v153
    %s157 = sld [smem:[#allocation7 + $0x100]]
    %v158 = vstv %s157
    %v159 = vmul.f32 %v158, %v81
    %s160 = sld [smem:[#allocation7 + $0x101]]
    %v161 = vstv %s160
    %v162 = vmul.f32 %v161, %v83
    %v163 = vadd.f32 %v159, %v162
    %s164 = sld [smem:[#allocation7 + $0x102]]
    %v165 = vstv %s164
    %v166 = vmul.f32 %v165, %v85
    %v167 = vadd.f32 %v163, %v166
    %s168 = sld [smem:[#allocation7 + $0x103]]
    %v169 = vstv %s168
    %v170 = vmul.f32 %v169, %v87
    %v171 = vadd.f32 %v167, %v170
    %s172 = sld [smem:[#allocation8 + $0x2]]
    %v173 = vstv %s172
    %v174 = vadd.f32 %v171, %v173
    %v175 = vtanh.pop %v174
    %s176 = sld [smem:[#allocation9 + $0x2]]
    %v177 = vstv %s176
    %v178 = vadd.f32 %v171, %v177
    %v179 = vtanh.pop %v178
    %v180 = vmul.f32 %v175, 9.0
    %v181 = vmul.f32 %v179, 8.0
    %v182 = vsub.f32 %v180, %v181
    %v183 = vmul.f32 %v114, %v85
    %v184 = vmul.f32 %v116, %v182
    %v185 = vadd.f32 %v183, %v184
    %s186 = scalar_lea.vmem [#allocation12], 2
    %187 = vst.msk [vmem:[%s186] ss:$8 sm:$0x3] %vm122, %v185
    %188 = vst.msk [vmem:[%s186] ss:$8 sm:$0x0] %vm122, %v185
    %s189 = sld [smem:[#allocation7 + $0x180]]
    %v190 = vstv %s189
    %v191 = vmul.f32 %v190, %v81
    %s192 = sld [smem:[#allocation7 + $0x181]]
    %v193 = vstv %s192
    %v194 = vmul.f32 %v193, %v83
    %v195 = vadd.f32 %v191, %v194
    %s196 = sld [smem:[#allocation7 + $0x182]]
    %v197 = vstv %s196
    %v198 = vmul.f32 %v197, %v85
    %v199 = vadd.f32 %v195, %v198
    %s200 = sld [smem:[#allocation7 + $0x183]]
    %v201 = vstv %s200
    %v202 = vmul.f32 %v201, %v87
    %v203 = vadd.f32 %v199, %v202
    %s204 = sld [smem:[#allocation8 + $0x3]]
    %v205 = vstv %s204
    %v206 = vadd.f32 %v203, %v205
    %v207 = vtanh.pop %v206
    %s208 = sld [smem:[#allocation9 + $0x3]]
    %v209 = vstv %s208
    %v210 = vadd.f32 %v203, %v209
    %v211 = vtanh.pop %v210
    %v212 = vmul.f32 %v207, 9.0
    %v213 = vmul.f32 %v211, 8.0
    %v214 = vsub.f32 %v212, %v213
    %v215 = vmul.f32 %v114, %v87
    %v216 = vmul.f32 %v116, %v214
    %v217 = vadd.f32 %v215, %v216
    %s218 = scalar_lea.vmem [#allocation12], 3
    %219 = vst.msk [vmem:[%s218] ss:$8 sm:$0x3] %vm122, %v217
    %220 = vst.msk [vmem:[%s218] ss:$8 sm:$0x0] %vm122, %v217
    %s221 = sld [smem:[#allocation11 + $0x80]]
    %s222 = sld [smem:[#allocation11 + $0x81]]
    %s223 = scalar_lea.vmem [#allocation2], 4
    %v224 = vld [vmem:[%s223] ss:$8 sm:$0x3]
    %s225 = scalar_lea.vmem [#allocation2], 5
    %v226 = vld [vmem:[%s225] ss:$8 sm:$0x3]
    %s227 = scalar_lea.vmem [#allocation2], 6
    %v228 = vld [vmem:[%s227] ss:$8 sm:$0x3]
    %s229 = scalar_lea.vmem [#allocation2], 7
    %v230 = vld [vmem:[%s229] ss:$8 sm:$0x3]
    %s231 = sld [smem:[#allocation7]]
    %v232 = vstv %s231
    %v233 = vmul.f32 %v232, %v224
    %s234 = sld [smem:[#allocation7 + $0x1]]
    %v235 = vstv %s234
    %v236 = vmul.f32 %v235, %v226
    %v237 = vadd.f32 %v233, %v236
    %s238 = sld [smem:[#allocation7 + $0x2]]
    %v239 = vstv %s238
    %v240 = vmul.f32 %v239, %v228
    %v241 = vadd.f32 %v237, %v240
    %s242 = sld [smem:[#allocation7 + $0x3]]
    %v243 = vstv %s242
    %v244 = vmul.f32 %v243, %v230
    %v245 = vadd.f32 %v241, %v244
    %s246 = sld [smem:[#allocation8 + $0x80]]
    %v247 = vstv %s246
    %v248 = vadd.f32 %v245, %v247
    %v249 = vtanh.pop %v248
    %s250 = sld [smem:[#allocation9 + $0x80]]
    %v251 = vstv %s250
    %v252 = vadd.f32 %v245, %v251
    %v253 = vtanh.pop %v252
    %v254 = vmul.f32 %v249, 9.0
    %v255 = vmul.f32 %v253, 8.0
    %v256 = vsub.f32 %v254, %v255
    %v257 = vstv %s221
    %v258 = vmul.f32 %v257, %v224
    %v259 = vstv %s222
    %v260 = vmul.f32 %v259, %v256
    %v261 = vadd.f32 %v258, %v260
    %s262 = scalar_lea.vmem [#allocation12], 4
    %263 = vst.msk [vmem:[%s262] ss:$8 sm:$0x3] %vm122, %v261
    %264 = vst.msk [vmem:[%s262] ss:$8 sm:$0x0] %vm122, %v261
    %s265 = sld [smem:[#allocation7 + $0x80]]
    %v266 = vstv %s265
    %v267 = vmul.f32 %v266, %v224
    %s268 = sld [smem:[#allocation7 + $0x81]]
    %v269 = vstv %s268
    %v270 = vmul.f32 %v269, %v226
    %v271 = vadd.f32 %v267, %v270
    %s272 = sld [smem:[#allocation7 + $0x82]]
    %v273 = vstv %s272
    %v274 = vmul.f32 %v273, %v228
    %v275 = vadd.f32 %v271, %v274
    %s276 = sld [smem:[#allocation7 + $0x83]]
    %v277 = vstv %s276
    %v278 = vmul.f32 %v277, %v230
    %v279 = vadd.f32 %v275, %v278
    %s280 = sld [smem:[#allocation8 + $0x81]]
    %v281 = vstv %s280
    %v282 = vadd.f32 %v279, %v281
    %v283 = vtanh.pop %v282
    %s284 = sld [smem:[#allocation9 + $0x81]]
    %v285 = vstv %s284
    %v286 = vadd.f32 %v279, %v285
    %v287 = vtanh.pop %v286
    %v288 = vmul.f32 %v283, 9.0
    %v289 = vmul.f32 %v287, 8.0
    %v290 = vsub.f32 %v288, %v289
    %v291 = vmul.f32 %v257, %v226
    %v292 = vmul.f32 %v259, %v290
    %v293 = vadd.f32 %v291, %v292
    %s294 = scalar_lea.vmem [#allocation12], 5
    %295 = vst.msk [vmem:[%s294] ss:$8 sm:$0x3] %vm122, %v293
    %296 = vst.msk [vmem:[%s294] ss:$8 sm:$0x0] %vm122, %v293
    %s297 = sld [smem:[#allocation7 + $0x100]]
    %v298 = vstv %s297
    %v299 = vmul.f32 %v298, %v224
    %s300 = sld [smem:[#allocation7 + $0x101]]
    %v301 = vstv %s300
    %v302 = vmul.f32 %v301, %v226
    %v303 = vadd.f32 %v299, %v302
    %s304 = sld [smem:[#allocation7 + $0x102]]
    %v305 = vstv %s304
    %v306 = vmul.f32 %v305, %v228
    %v307 = vadd.f32 %v303, %v306
    %s308 = sld [smem:[#allocation7 + $0x103]]
    %v309 = vstv %s308
    %v310 = vmul.f32 %v309, %v230
    %v311 = vadd.f32 %v307, %v310
    %s312 = sld [smem:[#allocation8 + $0x82]]
    %v313 = vstv %s312
    %v314 = vadd.f32 %v311, %v313
    %v315 = vtanh.pop %v314
    %s316 = sld [smem:[#allocation9 + $0x82]]
    %v317 = vstv %s316
    %v318 = vadd.f32 %v311, %v317
    %v319 = vtanh.pop %v318
    %v320 = vmul.f32 %v315, 9.0
    %v321 = vmul.f32 %v319, 8.0
    %v322 = vsub.f32 %v320, %v321
    %v323 = vmul.f32 %v257, %v228
    %v324 = vmul.f32 %v259, %v322
    %v325 = vadd.f32 %v323, %v324
    %s326 = scalar_lea.vmem [#allocation12], 6
    %327 = vst.msk [vmem:[%s326] ss:$8 sm:$0x3] %vm122, %v325
    %328 = vst.msk [vmem:[%s326] ss:$8 sm:$0x0] %vm122, %v325
    %s329 = sld [smem:[#allocation7 + $0x180]]
    %v330 = vstv %s329
    %v331 = vmul.f32 %v330, %v224
    %s332 = sld [smem:[#allocation7 + $0x181]]
    %v333 = vstv %s332
    %v334 = vmul.f32 %v333, %v226
    %v335 = vadd.f32 %v331, %v334
    %s336 = sld [smem:[#allocation7 + $0x182]]
    %v337 = vstv %s336
    %v338 = vmul.f32 %v337, %v228
    %v339 = vadd.f32 %v335, %v338
    %s340 = sld [smem:[#allocation7 + $0x183]]
    %v341 = vstv %s340
    %v342 = vmul.f32 %v341, %v230
    %v343 = vadd.f32 %v339, %v342
    %s344 = sld [smem:[#allocation8 + $0x83]]
    %v345 = vstv %s344
    %v346 = vadd.f32 %v343, %v345
    %v347 = vtanh.pop %v346
    %s348 = sld [smem:[#allocation9 + $0x83]]
    %v349 = vstv %s348
    %v350 = vadd.f32 %v343, %v349
    %v351 = vtanh.pop %v350
    %v352 = vmul.f32 %v347, 9.0
    %v353 = vmul.f32 %v351, 8.0
    %v354 = vsub.f32 %v352, %v353
    %v355 = vmul.f32 %v257, %v230
    %v356 = vmul.f32 %v259, %v354
    %v357 = vadd.f32 %v355, %v356
    %s358 = scalar_lea.vmem [#allocation12], 7
    %359 = vst.msk [vmem:[%s358] ss:$8 sm:$0x3] %vm122, %v357
    %360 = vst.msk [vmem:[%s358] ss:$8 sm:$0x0] %vm122, %v357
    // Predicated region
    $region42: #{tpu_custom_call.1} parent=1 // pred_check
      _
    $region43: #{tpu_custom_call.1} parent=1 // pred_check_branch
      %362 = sbr.rel (0) target = $region45
    $region44: #{tpu_custom_call.1} parent=1 // pred_region
      %s364 = ssub.s32 256, 256
      %365 = vsyncadd [#allocation4], %s364
      %s367 = sshll.u32 [#allocation12], 4
      %s368 = int_to_ptr.vmem [resolvable:$true] %s367
      %370 = dma.vmem_to_hbm [thread:$0]  %s368, 256, %s5, [#allocation4]
    $region45: #{tpu_custom_call.1} parent=1 // pred_fallthru
      _
    // Predicated region
    $region46: #{tpu_custom_call.1} parent=1 // pred_check
      _
    $region47: #{tpu_custom_call.1} parent=1 // pred_check_branch
      %372 = sbr.rel (0) target = $region49
    $region48: #{tpu_custom_call.1} parent=1 // pred_region
      %373 = dma.done [#allocation4], 256
    $region49: #{tpu_custom_call.1} parent=1 // pred_fallthru
      _
    %374 = vsyncpa [#allocation3], 1
    %375 = vsyncpa [#allocation4], 1
    %376 = vsyncpa [#allocation5], 1
    %377 = vsyncpa [#allocation6], 1
    %378 = vsyncpa [#allocation10], 1

</llo_original>
